<compile_context>
chip_gen: v6e
topology: v6e:2x2x1
jax: 0.10.0
libtpu: 0.0.40
codegen_flags: <defaults>
</compile_context>

<pallas_src>
import functools

import jax
import jax.numpy as jnp
from jax import lax
from jax.experimental import pallas as pl
from jax.experimental.pallas import tpu as pltpu


def _head_kernel(x_ref, w_ref, o_ref, *, B, T, H, scale):
    # x_ref: (B*T, C)  -- all batches' tokens flattened -> one projection pass.
    # w_ref: (C, 3H)   -- fused [Wq | Wk | Wv] (pre-transposed).
    # o_ref: (B, T*H)  -- lane-dense output block (T*H == 128 lanes).
    x = x_ref[...]
    w = w_ref[...]

    # Single fused projection matmul (q, k, v in one MXU pass).
    qkv = jnp.dot(x, w, preferred_element_type=jnp.float32)      # (B*T, 3H)

    # Apply the 1/sqrt(H) scale to q (T*H elements) rather than the (T,T) scores.
    q = (qkv[:, 0 * H:1 * H] * scale).reshape(B, T, H)
    k = qkv[:, 1 * H:2 * H].reshape(B, T, H)
    v = qkv[:, 2 * H:3 * H].reshape(B, T, H)

    # Batched attention scores, contracting on H directly (no explicit k.T).
    wei = jnp.einsum("bqh,bkh->bqk", q, k,
                     preferred_element_type=jnp.float32)          # (B, T, T)

    # Causal (lower-triangular) mask == masked_fill(tril == 0, -inf).
    row = lax.broadcasted_iota(jnp.int32, (B, T, T), 1)
    col = lax.broadcasted_iota(jnp.int32, (B, T, T), 2)
    wei = jnp.where(col <= row, wei, -jnp.inf)

    # Numerically-stable softmax; reciprocal runs on the EUP slot, not VALU divide.
    m = jnp.max(wei, axis=-1, keepdims=True)
    p = jnp.exp(wei - m)
    denom = jnp.sum(p, axis=-1, keepdims=True)
    p = p * pl.reciprocal(denom, approx=False)

    out = jnp.einsum("bqk,bkh->bqh", p, v,
                     preferred_element_type=jnp.float32)          # (B, T, H)
    out = out.astype(o_ref.dtype)

    # Lane-dense writeback: o_ref's last dim is T*H == 128, so the output block
    # DMA is dense.  Assemble each 128-lane row with per-t static-slice stores
    # (a (T,H)->(T*H,) in-register reshape would need a cross-lane shuffle).
    for t in range(T):
        o_ref[:, t * H:(t + 1) * H] = out[:, t, :]


def head_attention(x, wq_t, wk_t, wv_t, head_size):
    """x: (B, T, C); wq_t/wk_t/wv_t: (C, H) (i.e. PyTorch Linear weight, transposed)."""
    B, T, C = x.shape
    H = wq_t.shape[1]
    scale = float(head_size) ** -0.5

    # Wrapper-side layout plumbing (free in XLA): flatten tokens and fuse weights.
    x2d = x.reshape(B * T, C)                                  # (B*T, C)
    w_qkv = jnp.concatenate([wq_t, wk_t, wv_t], axis=1)        # (C, 3H)

    kernel = functools.partial(_head_kernel, B=B, T=T, H=H, scale=scale)

    out_flat = pl.pallas_call(
        kernel,
        out_shape=jax.ShapeDtypeStruct((B, T * H), x.dtype),
        grid_spec=pltpu.PrefetchScalarGridSpec(
            num_scalar_prefetch=0,
            grid=(1,),                                         # single step: whole problem
            in_specs=[
                pl.BlockSpec((B * T, C), lambda i: (0, 0)),    # flattened activations
                pl.BlockSpec((C, 3 * H), lambda i: (0, 0)),    # fused Wq|Wk|Wv
            ],
            out_specs=pl.BlockSpec((B, T * H), lambda i: (0, 0)),  # 128-lane-dense output
        ),
        compiler_params=pltpu.CompilerParams(
            dimension_semantics=("arbitrary",),
        ),
    )(x2d, w_qkv)

    return out_flat.reshape(B, T, H)


def reference_head(x, wq_t, wk_t, wv_t, head_size):
    q = x @ wq_t
    k = x @ wk_t
    v = x @ wv_t
    wei = (q @ jnp.swapaxes(k, -2, -1)) * (float(head_size) ** -0.5)
    T = x.shape[1]
    mask = jnp.tril(jnp.ones((T, T), dtype=bool))
    wei = jnp.where(mask, wei, -jnp.inf)
    wei = jax.nn.softmax(wei, axis=-1)
    return wei @ v


if __name__ == "__main__":
    # Small shapes consistent with the module: block_size (seq) = 8,
    # embed_size = 32, head_size = 16, batch = 2.
    B, T, C, H = 2, 8, 32, 16

    key = jax.random.PRNGKey(0)
    kx, kq, kk, kv = jax.random.split(key, 4)

    x = jax.random.normal(kx, (B, T, C), dtype=jnp.float32)
    # PyTorch nn.Linear weights have shape (H, C); store transposed (C, H).
    wq_t = (jax.random.normal(kq, (H, C), dtype=jnp.float32) * (C ** -0.5)).T
    wk_t = (jax.random.normal(kk, (H, C), dtype=jnp.float32) * (C ** -0.5)).T
    wv_t = (jax.random.normal(kv, (H, C), dtype=jnp.float32) * (C ** -0.5)).T

    out = head_attention(x, wq_t, wk_t, wv_t, head_size=H)
    out = jax.block_until_ready(out)

    ref = reference_head(x, wq_t, wk_t, wv_t, head_size=H)
    assert out.shape == (B, T, H)
    assert jnp.allclose(out, ref, atol=2e-5, rtol=2e-5)

    print("KERNEL_OK")
</pallas_src>

<mosaic_0001>
module attributes {stable_mosaic.version = 11 : i64} {
  func.func @_head_kernel(%arg0: i32, %arg1: memref<16x32xf32, #tpu.memory_space<vmem>>, %arg2: memref<32x48xf32, #tpu.memory_space<vmem>>, %arg3: memref<2x128xf32, #tpu.memory_space<vmem>>) attributes {dimension_semantics = [#tpu.dimension_semantics<arbitrary>], iteration_bounds = array<i64: 1>, scalar_prefetch = 0 : i64, scratch_operands = 0 : i64, tpu.core_type = #tpu.core_type<tc>, window_params = [{pipeline_mode = #tpu.pipeline_mode<synchronous>, transform_indices = @transform_0, window_bounds = array<i64: 16, 32>}, {pipeline_mode = #tpu.pipeline_mode<synchronous>, transform_indices = @transform_1, window_bounds = array<i64: 32, 48>}, {pipeline_mode = #tpu.pipeline_mode<synchronous>, transform_indices = @transform_2, window_bounds = array<i64: 2, 128>}]} {
    %c0 = arith.constant 0 : index
    %c0_0 = arith.constant 0 : index
    %0 = vector.load %arg1[%c0, %c0_0] : memref<16x32xf32, #tpu.memory_space<vmem>>, vector<16x32xf32>
    %c0_1 = arith.constant 0 : index
    %c0_2 = arith.constant 0 : index
    %1 = vector.load %arg2[%c0_1, %c0_2] : memref<32x48xf32, #tpu.memory_space<vmem>>, vector<32x48xf32>
    %cst = arith.constant dense<0.000000e+00> : vector<16x48xf32>
    %2 = tpu.matmul %0, %1, %cst {dimension_numbers = #tpu.dot_dimension_numbers<[1], [0], [0], [1], [0, 0, 1, 1], [], []>} : vector<16x32xf32>, vector<32x48xf32>, vector<16x48xf32> -> vector<16x48xf32>
    %3 = vector.extract_strided_slice %2 {offsets = [0, 0], sizes = [16, 16], strides = [1, 1]} : vector<16x48xf32> to vector<16x16xf32>
    %cst_3 = arith.constant 2.500000e-01 : f32
    %4 = vector.broadcast %cst_3 : f32 to vector<16x16xf32>
    %5 = arith.mulf %3, %4 : vector<16x16xf32>
    %6 = vector.shape_cast %5 : vector<16x16xf32> to vector<2x8x16xf32>
    %7 = vector.extract_strided_slice %2 {offsets = [0, 16], sizes = [16, 16], strides = [1, 1]} : vector<16x48xf32> to vector<16x16xf32>
    %8 = vector.shape_cast %7 : vector<16x16xf32> to vector<2x8x16xf32>
    %9 = vector.extract_strided_slice %2 {offsets = [0, 32], sizes = [16, 16], strides = [1, 1]} : vector<16x48xf32> to vector<16x16xf32>
    %10 = vector.shape_cast %9 : vector<16x16xf32> to vector<2x8x16xf32>
    "tpu.trace_start"() <{level = 10 : i32, message = "bqh,bkh->bqk"}> : () -> ()
    %cst_4 = arith.constant dense<0.000000e+00> : vector<2x8x8xf32>
    %11 = tpu.matmul %6, %8, %cst_4 {dimension_numbers = #tpu.dot_dimension_numbers<[2], [2], [1], [1], [0, 0, 0, 1, 1, 1], [0], [0]>} : vector<2x8x16xf32>, vector<2x8x16xf32>, vector<2x8x8xf32> -> vector<2x8x8xf32>
    "tpu.trace_stop"() : () -> ()
    %12 = tpu.iota {dimensions = array<i32: 1>} : vector<2x8x8xi32>
    %13 = tpu.iota {dimensions = array<i32: 2>} : vector<2x8x8xi32>
    %14 = arith.cmpi sle, %13, %12 : vector<2x8x8xi32>
    %cst_5 = arith.constant 0xFF800000 : f32
    %15 = vector.broadcast %cst_5 : f32 to vector<2x8x8xf32>
    %16 = arith.select %14, %11, %15 : vector<2x8x8xi1>, vector<2x8x8xf32>
    %cst_6 = arith.constant dense<0xFF800000> : vector<2x8xf32>
    %17 = vector.multi_reduction <maximumf>, %16, %cst_6 [2] : vector<2x8x8xf32> to vector<2x8xf32>
    %18 = vector.shape_cast %17 : vector<2x8xf32> to vector<2x8x1xf32>
    %19 = vector.broadcast %18 : vector<2x8x1xf32> to vector<2x8x8xf32>
    %20 = arith.subf %16, %19 : vector<2x8x8xf32>
    %21 = math.exp %20 : vector<2x8x8xf32>
    %cst_7 = arith.constant dense<0.000000e+00> : vector<2x8xf32>
    %22 = vector.multi_reduction <add>, %21, %cst_7 [2] : vector<2x8x8xf32> to vector<2x8xf32>
    %23 = vector.shape_cast %22 : vector<2x8xf32> to vector<2x8x1xf32>
    %24 = tpu.reciprocal %23 : vector<2x8x1xf32> -> vector<2x8x1xf32>
    %25 = vector.broadcast %24 : vector<2x8x1xf32> to vector<2x8x8xf32>
    %26 = arith.mulf %21, %25 : vector<2x8x8xf32>
    "tpu.trace_start"() <{level = 10 : i32, message = "bqk,bkh->bqh"}> : () -> ()
    %cst_8 = arith.constant dense<0.000000e+00> : vector<2x8x16xf32>
    %27 = tpu.matmul %26, %10, %cst_8 {dimension_numbers = #tpu.dot_dimension_numbers<[2], [1], [1], [2], [0, 0, 0, 1, 1, 2], [0], [0]>} : vector<2x8x8xf32>, vector<2x8x16xf32>, vector<2x8x16xf32> -> vector<2x8x16xf32>
    "tpu.trace_stop"() : () -> ()
    %28 = vector.extract_strided_slice %27 {offsets = [0, 0, 0], sizes = [2, 1, 16], strides = [1, 1, 1]} : vector<2x8x16xf32> to vector<2x1x16xf32>
    %29 = vector.shape_cast %28 : vector<2x1x16xf32> to vector<2x16xf32>
    %c0_9 = arith.constant 0 : index
    %c0_10 = arith.constant 0 : index
    %30 = vector.load %arg3[%c0_9, %c0_10] : memref<2x128xf32, #tpu.memory_space<vmem>>, vector<2x16xf32>
    tpu.vector_store %arg3[%c0_9, %c0_10], %29 {strides = array<i32>} : memref<2x128xf32, #tpu.memory_space<vmem>>, vector<2x16xf32>,
    %31 = vector.extract_strided_slice %27 {offsets = [0, 1, 0], sizes = [2, 1, 16], strides = [1, 1, 1]} : vector<2x8x16xf32> to vector<2x1x16xf32>
    %32 = vector.shape_cast %31 : vector<2x1x16xf32> to vector<2x16xf32>
    %c0_11 = arith.constant 0 : index
    %c16 = arith.constant 16 : index
    %33 = vector.load %arg3[%c0_11, %c16] : memref<2x128xf32, #tpu.memory_space<vmem>>, vector<2x16xf32>
    tpu.vector_store %arg3[%c0_11, %c16], %32 {strides = array<i32>} : memref<2x128xf32, #tpu.memory_space<vmem>>, vector<2x16xf32>,
    %34 = vector.extract_strided_slice %27 {offsets = [0, 2, 0], sizes = [2, 1, 16], strides = [1, 1, 1]} : vector<2x8x16xf32> to vector<2x1x16xf32>
    %35 = vector.shape_cast %34 : vector<2x1x16xf32> to vector<2x16xf32>
    %c0_12 = arith.constant 0 : index
    %c32 = arith.constant 32 : index
    %36 = vector.load %arg3[%c0_12, %c32] : memref<2x128xf32, #tpu.memory_space<vmem>>, vector<2x16xf32>
    tpu.vector_store %arg3[%c0_12, %c32], %35 {strides = array<i32>} : memref<2x128xf32, #tpu.memory_space<vmem>>, vector<2x16xf32>,
    %37 = vector.extract_strided_slice %27 {offsets = [0, 3, 0], sizes = [2, 1, 16], strides = [1, 1, 1]} : vector<2x8x16xf32> to vector<2x1x16xf32>
    %38 = vector.shape_cast %37 : vector<2x1x16xf32> to vector<2x16xf32>
    %c0_13 = arith.constant 0 : index
    %c48 = arith.constant 48 : index
    %39 = vector.load %arg3[%c0_13, %c48] : memref<2x128xf32, #tpu.memory_space<vmem>>, vector<2x16xf32>
    tpu.vector_store %arg3[%c0_13, %c48], %38 {strides = array<i32>} : memref<2x128xf32, #tpu.memory_space<vmem>>, vector<2x16xf32>,
    %40 = vector.extract_strided_slice %27 {offsets = [0, 4, 0], sizes = [2, 1, 16], strides = [1, 1, 1]} : vector<2x8x16xf32> to vector<2x1x16xf32>
    %41 = vector.shape_cast %40 : vector<2x1x16xf32> to vector<2x16xf32>
    %c0_14 = arith.constant 0 : index
    %c64 = arith.constant 64 : index
    %42 = vector.load %arg3[%c0_14, %c64] : memref<2x128xf32, #tpu.memory_space<vmem>>, vector<2x16xf32>
    tpu.vector_store %arg3[%c0_14, %c64], %41 {strides = array<i32>} : memref<2x128xf32, #tpu.memory_space<vmem>>, vector<2x16xf32>,
    %43 = vector.extract_strided_slice %27 {offsets = [0, 5, 0], sizes = [2, 1, 16], strides = [1, 1, 1]} : vector<2x8x16xf32> to vector<2x1x16xf32>
    %44 = vector.shape_cast %43 : vector<2x1x16xf32> to vector<2x16xf32>
    %c0_15 = arith.constant 0 : index
    %c80 = arith.constant 80 : index
    %45 = vector.load %arg3[%c0_15, %c80] : memref<2x128xf32, #tpu.memory_space<vmem>>, vector<2x16xf32>
    tpu.vector_store %arg3[%c0_15, %c80], %44 {strides = array<i32>} : memref<2x128xf32, #tpu.memory_space<vmem>>, vector<2x16xf32>,
    %46 = vector.extract_strided_slice %27 {offsets = [0, 6, 0], sizes = [2, 1, 16], strides = [1, 1, 1]} : vector<2x8x16xf32> to vector<2x1x16xf32>
    %47 = vector.shape_cast %46 : vector<2x1x16xf32> to vector<2x16xf32>
    %c0_16 = arith.constant 0 : index
    %c96 = arith.constant 96 : index
    %48 = vector.load %arg3[%c0_16, %c96] : memref<2x128xf32, #tpu.memory_space<vmem>>, vector<2x16xf32>
    tpu.vector_store %arg3[%c0_16, %c96], %47 {strides = array<i32>} : memref<2x128xf32, #tpu.memory_space<vmem>>, vector<2x16xf32>,
    %49 = vector.extract_strided_slice %27 {offsets = [0, 7, 0], sizes = [2, 1, 16], strides = [1, 1, 1]} : vector<2x8x16xf32> to vector<2x1x16xf32>
    %50 = vector.shape_cast %49 : vector<2x1x16xf32> to vector<2x16xf32>
    %c0_17 = arith.constant 0 : index
    %c112 = arith.constant 112 : index
    %51 = vector.load %arg3[%c0_17, %c112] : memref<2x128xf32, #tpu.memory_space<vmem>>, vector<2x16xf32>
    tpu.vector_store %arg3[%c0_17, %c112], %50 {strides = array<i32>} : memref<2x128xf32, #tpu.memory_space<vmem>>, vector<2x16xf32>,
    return
  }
  func.func @transform_0(%arg0: i32) -> (i32, i32) {
    %c0_i32 = arith.constant 0 : i32
    %c0_i32_0 = arith.constant 0 : i32
    %c0_i32_1 = arith.constant 0 : i32
    return %c0_i32, %c0_i32_0 : i32, i32
  }
  func.func @transform_1(%arg0: i32) -> (i32, i32) {
    %c0_i32 = arith.constant 0 : i32
    %c0_i32_0 = arith.constant 0 : i32
    %c0_i32_1 = arith.constant 0 : i32
    return %c0_i32, %c0_i32_0 : i32, i32
  }
  func.func @transform_2(%arg0: i32) -> (i32, i32) {
    %c0_i32 = arith.constant 0 : i32
    %c0_i32_0 = arith.constant 0 : i32
    %c0_i32_1 = arith.constant 0 : i32
    return %c0_i32, %c0_i32_0 : i32, i32
  }
}

</mosaic_0001>

<llo_original>
// kernel: tpu_custom_call.1
$region0: #{tpu_custom_call.1}
  #allocation0 [shape = 'u32[]', space=smem, size = 0x4, offset = 0x4, fixed_abs, tag = 'smem constant byte address 0x4 - core index']
  #allocation1 [shape = 'u32[144,128]{1,0:T(1,128)}', space=vmem, size = 0x12000, scoped, tag = 'internal scratch']
  %s0 = inlined_call_operand.hbm [shape: f32[16,32], index: 0, kind: input, shape index: {}]
  %s1 = inlined_call_operand.hbm [shape: f32[32,48], index: 1, kind: input, shape index: {}]
  %s2 = inlined_call_operand.hbm [shape: f32[2,128], index: 2, kind: output, shape index: {}]
  %s3 = sld [smem:[#allocation0]]
  $region26: #{tpu_custom_call.1} parent=0
    _
  %s5 = ssub.s32 1, %s3
  %s6 = scalar_select 0, %s5, %s3
  $region1: #{tpu_custom_call.1} parent=0
    #allocation2 [shape = 'u8[8192]{0}', space=vmem, size = 0x2000, scoped, tag = 'input window, operand 0, single buffered']
    #allocation3 [shape = 's32[1]{0}', space=sflag, size = 0x4, scoped, tag = 'scoped memory for tpu_custom_call.1']
    #allocation4 [shape = 's32[1]{0}', space=sflag, size = 0x4, scoped, tag = 'scoped memory for tpu_custom_call.1']
    #allocation5 [shape = 'u8[16384]{0}', space=vmem, size = 0x4000, scoped, tag = 'input window, operand 1, single buffered']
    #allocation6 [shape = 's32[1]{0}', space=sflag, size = 0x4, scoped, tag = 'scoped memory for tpu_custom_call.1']
    #allocation7 [shape = 'u8[1024]{0}', space=vmem, size = 0x400, scoped, tag = 'output window, operand 0, single buffered']
    %7 = vsyncpa [#allocation3], 0
    %8 = vsyncpa [#allocation6], 0
    %9 = vsyncpa [#allocation4], 0
    // Predicated region
    $region2: #{tpu_custom_call.1} parent=1 // pred_check
      _
    $region3: #{tpu_custom_call.1} parent=1 // pred_check_branch
      %11 = sbr.rel (0) target = $region5
    $region4: #{tpu_custom_call.1} parent=1 // pred_region
      %s13 = ssub.s32 256, 256
      %14 = vsyncadd [#allocation3], %s13
      %s15 = sshll.u32 [#allocation2], 4
      %s16 = int_to_ptr.vmem [resolvable:$true] %s15
      %21 = dma.hbm_to_vmem [thread:$0]  %s0, 256, %s16, [#allocation3], 128, 128, 8
    $region5: #{tpu_custom_call.1} parent=1 // pred_fallthru
      _
    // Predicated region
    $region6: #{tpu_custom_call.1} parent=1 // pred_check
      _
    $region7: #{tpu_custom_call.1} parent=1 // pred_check_branch
      %23 = sbr.rel (0) target = $region9
    $region8: #{tpu_custom_call.1} parent=1 // pred_region
      %s25 = ssub.s32 512, 512
      %26 = vsyncadd [#allocation6], %s25
      %s27 = sshll.u32 [#allocation5], 4
      %s28 = int_to_ptr.vmem [resolvable:$true] %s27
      %33 = dma.hbm_to_vmem [thread:$0]  %s1, 512, %s28, [#allocation6], 128, 128, 8
    $region9: #{tpu_custom_call.1} parent=1 // pred_fallthru
      _
    // Predicated region
    $region10: #{tpu_custom_call.1} parent=1 // pred_check
      _
    $region11: #{tpu_custom_call.1} parent=1 // pred_check_branch
      %35 = sbr.rel (0) target = $region13
    $region12: #{tpu_custom_call.1} parent=1 // pred_region
      %36 = dma.done [#allocation3], 256
    $region13: #{tpu_custom_call.1} parent=1 // pred_fallthru
      _
    // Predicated region
    $region14: #{tpu_custom_call.1} parent=1 // pred_check
      _
    $region15: #{tpu_custom_call.1} parent=1 // pred_check_branch
      %38 = sbr.rel (0) target = $region17
    $region16: #{tpu_custom_call.1} parent=1 // pred_region
      %39 = dma.done [#allocation6], 512
    $region17: #{tpu_custom_call.1} parent=1 // pred_fallthru
      _
    %v40 = vld [vmem:[#allocation2] sm:$0xff]
    %v41 = vld [vmem:[#allocation2 + $0x8] sm:$0xff]
    %v42 = vld [vmem:[#allocation5] sm:$0xff]
    %v43 = vld [vmem:[#allocation5 + $0x8] sm:$0xff]
    %v44 = vld [vmem:[#allocation5 + $0x10] sm:$0xff]
    %v45 = vld [vmem:[#allocation5 + $0x18] sm:$0xff]
    %vm46 = vcmask 261120
    %v48 = vsel %vm46, %v40, 0
    %v51 = vsel %vm46, %v41, 0
    %53 = vmatprep.subr.mxu0 0.0
    %54 = vmatpush1.msra.mxu0 0.0
    %55 = vmatprep.subr.mxu0 0.0
    %56 = vmatpush1.msra.mxu0 0.0
    %57 = vmatprep.subr.mxu0 0.0
    %58 = vmatpush1.msra.mxu0 0.0
    %59 = vmatprep.subr.mxu0 0.0
    %60 = vmatpush1.msra.mxu0 0.0
    %61 = vmatprep.subr.mxu0 0.0
    %62 = vmatpush1.msra.mxu0 0.0
    %63 = vmatprep.subr.mxu0 0.0
    %64 = vmatpush1.msra.mxu0 0.0
    %65 = vmatprep.subr.mxu0 0.0
    %66 = vmatpush1.msra.mxu0 0.0
    %67 = vmatprep.subr.mxu0 0.0
    %68 = vmatpush1.msra.mxu0 0.0
    %69 = vmatprep.subr.mxu0 0.0
    %70 = vmatpush1.msra.mxu0 0.0
    %71 = vmatprep.subr.mxu0 0.0
    %72 = vmatpush1.msra.mxu0 0.0
    %73 = vmatprep.subr.mxu0 0.0
    %74 = vmatpush1.msra.mxu0 0.0
    %75 = vmatprep.subr.mxu0 0.0
    %76 = vmatpush1.msra.mxu0 0.0
    %77 = vmatprep.subr.mxu0 0.0
    %78 = vmatpush1.msra.mxu0 %v45
    %79 = vmatprep.subr.mxu0 0.0
    %80 = vmatpush1.msra.mxu0 %v44
    %81 = vmatprep.subr.mxu0 0.0
    %82 = vmatpush1.msra.mxu0 %v43
    %83 = vmatprep.subr.mxu0 0.0
    %84 = vmatpush1.msra.mxu0 %v42
    %85 = vmatprep.subr.mxu0 0.0
    %86 = vmatpush2.msra.mxu0 0.0
    %87 = vmatprep.subr.mxu0 0.0
    %88 = vmatpush2.msra.mxu0 0.0
    %89 = vmatprep.subr.mxu0 0.0
    %90 = vmatpush2.msra.mxu0 0.0
    %91 = vmatprep.subr.mxu0 0.0
    %92 = vmatpush2.msra.mxu0 0.0
    %93 = vmatprep.subr.mxu0 0.0
    %94 = vmatpush2.msra.mxu0 0.0
    %95 = vmatprep.subr.mxu0 0.0
    %96 = vmatpush2.msra.mxu0 0.0
    %97 = vmatprep.subr.mxu0 0.0
    %98 = vmatpush2.msra.mxu0 0.0
    %99 = vmatprep.subr.mxu0 0.0
    %100 = vmatpush2.msra.mxu0 0.0
    %101 = vmatprep.subr.mxu0 0.0
    %102 = vmatpush2.msra.mxu0 0.0
    %103 = vmatprep.subr.mxu0 0.0
    %104 = vmatpush2.msra.mxu0 0.0
    %105 = vmatprep.subr.mxu0 0.0
    %106 = vmatpush2.msra.mxu0 0.0
    %107 = vmatprep.subr.mxu0 0.0
    %108 = vmatpush2.msra.mxu0 0.0
    %109 = vmatprep.subr.mxu0 0.0
    %110 = vmatpush2.msra.mxu0 0.0
    %111 = vmatprep.subr.mxu0 0.0
    %112 = vmatpush2.msra.mxu0 0.0
    %113 = vmatprep.subr.mxu0 0.0
    %114 = vmatpush2.msra.mxu0 0.0
    %115 = vmatprep.subr.mxu0 0.0
    %116 = vmatpush2.msra.mxu0 0.0
    %117 = vmatprep.mubr.f32.mxu0 0.0
    %118 = vmatmul.mubr.f32.gmra.mxu0 %v48
    %v119 = vpop.f32.mrf.mxu0
    %v120 = vadd.f32 0.0, %v119
    %v121 = vpop.f32.mrf.mxu0
    %122 = vmatprep.mubr.f32.mxu0 0.0
    %123 = vmatmul.mubr.f32.gmra.mxu0 %v51
    %v124 = vpop.f32.mrf.mxu0
    %v125 = vadd.f32 0.0, %v124
    %v126 = vpop.f32.mrf.mxu0
    %127 = vdwg.mxu0
    %v128 = vmul.f32 %v120, 0.25
    %v129 = vmul.f32 %v125, 0.25
    %131 = vrot.lane.b32.xlu0 %v120, 112
    %v132 = vpop.permute.xlu0 %131
    %vm133 = vcmask 130048
    %v135 = vsel %vm133, %v128, 0
    %v137 = vsel %vm133, %v132, 0
    %139 = vmatprep.subr.mxu0 0.0
    %140 = vmatpush1.xpose.msra.mxu0 0.0
    %141 = vmatprep.subr.mxu0 0.0
    %142 = vmatpush1.xpose.msra.mxu0 0.0
    %143 = vmatprep.subr.mxu0 0.0
    %144 = vmatpush1.xpose.msra.mxu0 0.0
    %145 = vmatprep.subr.mxu0 0.0
    %146 = vmatpush1.xpose.msra.mxu0 0.0
    %147 = vmatprep.subr.mxu0 0.0
    %148 = vmatpush1.xpose.msra.mxu0 0.0
    %149 = vmatprep.subr.mxu0 0.0
    %150 = vmatpush1.xpose.msra.mxu0 0.0
    %151 = vmatprep.subr.mxu0 0.0
    %152 = vmatpush1.xpose.msra.mxu0 0.0
    %153 = vmatprep.subr.mxu0 0.0
    %154 = vmatpush1.xpose.msra.mxu0 0.0
    %155 = vmatprep.subr.mxu0 0.0
    %156 = vmatpush1.xpose.msra.mxu0 0.0
    %157 = vmatprep.subr.mxu0 0.0
    %158 = vmatpush1.xpose.msra.mxu0 0.0
    %159 = vmatprep.subr.mxu0 0.0
    %160 = vmatpush1.xpose.msra.mxu0 0.0
    %161 = vmatprep.subr.mxu0 0.0
    %162 = vmatpush1.xpose.msra.mxu0 0.0
    %163 = vmatprep.subr.mxu0 0.0
    %164 = vmatpush1.xpose.msra.mxu0 0.0
    %165 = vmatprep.subr.mxu0 0.0
    %166 = vmatpush1.xpose.msra.mxu0 0.0
    %167 = vmatprep.subr.mxu0 0.0
    %168 = vmatpush1.xpose.msra.mxu0 0.0
    %169 = vmatprep.subr.mxu0 0.0
    %170 = vmatpush1.xpose.msra.mxu0 %v137
    %171 = vmatprep.subr.mxu0 0.0
    %172 = vmatpush2.xpose.msra.mxu0 0.0
    %173 = vmatprep.subr.mxu0 0.0
    %174 = vmatpush2.xpose.msra.mxu0 0.0
    %175 = vmatprep.subr.mxu0 0.0
    %176 = vmatpush2.xpose.msra.mxu0 0.0
    %177 = vmatprep.subr.mxu0 0.0
    %178 = vmatpush2.xpose.msra.mxu0 0.0
    %179 = vmatprep.subr.mxu0 0.0
    %180 = vmatpush2.xpose.msra.mxu0 0.0
    %181 = vmatprep.subr.mxu0 0.0
    %182 = vmatpush2.xpose.msra.mxu0 0.0
    %183 = vmatprep.subr.mxu0 0.0
    %184 = vmatpush2.xpose.msra.mxu0 0.0
    %185 = vmatprep.subr.mxu0 0.0
    %186 = vmatpush2.xpose.msra.mxu0 0.0
    %187 = vmatprep.subr.mxu0 0.0
    %188 = vmatpush2.xpose.msra.mxu0 0.0
    %189 = vmatprep.subr.mxu0 0.0
    %190 = vmatpush2.xpose.msra.mxu0 0.0
    %191 = vmatprep.subr.mxu0 0.0
    %192 = vmatpush2.xpose.msra.mxu0 0.0
    %193 = vmatprep.subr.mxu0 0.0
    %194 = vmatpush2.xpose.msra.mxu0 0.0
    %195 = vmatprep.subr.mxu0 0.0
    %196 = vmatpush2.xpose.msra.mxu0 0.0
    %197 = vmatprep.subr.mxu0 0.0
    %198 = vmatpush2.xpose.msra.mxu0 0.0
    %199 = vmatprep.subr.mxu0 0.0
    %200 = vmatpush2.xpose.msra.mxu0 0.0
    %201 = vmatprep.subr.mxu0 0.0
    %202 = vmatpush2.xpose.msra.mxu0 0.0
    %203 = vmatprep.mubr.f32.mxu0 0.0
    %204 = vmatmul.mubr.f32.gmra.mxu0 %v135
    %v205 = vpop.f32.mrf.mxu0
    %v206 = vadd.f32 0.0, %v205
    %v207 = vpop.f32.mrf.mxu0
    %208 = vdwg.mxu0
    %210 = vrot.lane.b32.xlu0 %v125, 112
    %v211 = vpop.permute.xlu0 %210
    %v213 = vsel %vm133, %v129, 0
    %v215 = vsel %vm133, %v211, 0
    %217 = vmatprep.subr.mxu0 0.0
    %218 = vmatpush1.xpose.msra.mxu0 0.0
    %219 = vmatprep.subr.mxu0 0.0
    %220 = vmatpush1.xpose.msra.mxu0 0.0
    %221 = vmatprep.subr.mxu0 0.0
    %222 = vmatpush1.xpose.msra.mxu0 0.0
    %223 = vmatprep.subr.mxu0 0.0
    %224 = vmatpush1.xpose.msra.mxu0 0.0
    %225 = vmatprep.subr.mxu0 0.0
    %226 = vmatpush1.xpose.msra.mxu0 0.0
    %227 = vmatprep.subr.mxu0 0.0
    %228 = vmatpush1.xpose.msra.mxu0 0.0
    %229 = vmatprep.subr.mxu0 0.0
    %230 = vmatpush1.xpose.msra.mxu0 0.0
    %231 = vmatprep.subr.mxu0 0.0
    %232 = vmatpush1.xpose.msra.mxu0 0.0
    %233 = vmatprep.subr.mxu0 0.0
    %234 = vmatpush1.xpose.msra.mxu0 0.0
    %235 = vmatprep.subr.mxu0 0.0
    %236 = vmatpush1.xpose.msra.mxu0 0.0
    %237 = vmatprep.subr.mxu0 0.0
    %238 = vmatpush1.xpose.msra.mxu0 0.0
    %239 = vmatprep.subr.mxu0 0.0
    %240 = vmatpush1.xpose.msra.mxu0 0.0
    %241 = vmatprep.subr.mxu0 0.0
    %242 = vmatpush1.xpose.msra.mxu0 0.0
    %243 = vmatprep.subr.mxu0 0.0
    %244 = vmatpush1.xpose.msra.mxu0 0.0
    %245 = vmatprep.subr.mxu0 0.0
    %246 = vmatpush1.xpose.msra.mxu0 0.0
    %247 = vmatprep.subr.mxu0 0.0
    %248 = vmatpush1.xpose.msra.mxu0 %v215
    %249 = vmatprep.subr.mxu0 0.0
    %250 = vmatpush2.xpose.msra.mxu0 0.0
    %251 = vmatprep.subr.mxu0 0.0
    %252 = vmatpush2.xpose.msra.mxu0 0.0
    %253 = vmatprep.subr.mxu0 0.0
    %254 = vmatpush2.xpose.msra.mxu0 0.0
    %255 = vmatprep.subr.mxu0 0.0
    %256 = vmatpush2.xpose.msra.mxu0 0.0
    %257 = vmatprep.subr.mxu0 0.0
    %258 = vmatpush2.xpose.msra.mxu0 0.0
    %259 = vmatprep.subr.mxu0 0.0
    %260 = vmatpush2.xpose.msra.mxu0 0.0
    %261 = vmatprep.subr.mxu0 0.0
    %262 = vmatpush2.xpose.msra.mxu0 0.0
    %263 = vmatprep.subr.mxu0 0.0
    %264 = vmatpush2.xpose.msra.mxu0 0.0
    %265 = vmatprep.subr.mxu0 0.0
    %266 = vmatpush2.xpose.msra.mxu0 0.0
    %267 = vmatprep.subr.mxu0 0.0
    %268 = vmatpush2.xpose.msra.mxu0 0.0
    %269 = vmatprep.subr.mxu0 0.0
    %270 = vmatpush2.xpose.msra.mxu0 0.0
    %271 = vmatprep.subr.mxu0 0.0
    %272 = vmatpush2.xpose.msra.mxu0 0.0
    %273 = vmatprep.subr.mxu0 0.0
    %274 = vmatpush2.xpose.msra.mxu0 0.0
    %275 = vmatprep.subr.mxu0 0.0
    %276 = vmatpush2.xpose.msra.mxu0 0.0
    %277 = vmatprep.subr.mxu0 0.0
    %278 = vmatpush2.xpose.msra.mxu0 0.0
    %279 = vmatprep.subr.mxu0 0.0
    %280 = vmatpush2.xpose.msra.mxu0 0.0
    %281 = vmatprep.mubr.f32.mxu0 0.0
    %282 = vmatmul.mubr.f32.gmra.mxu0 %v213
    %v283 = vpop.f32.mrf.mxu0
    %v284 = vadd.f32 0.0, %v283
    %v285 = vpop.f32.mrf.mxu0
    %286 = vdwg.mxu0
    %v287 = vlaneseq
    %v288 = vshrl.u32 %v287, 7
    %v289 = vlaneseq
    %v290 = vand.u32 %v289, 127
    %vm291 = vcmp.le.s32.totalorder %v290, %v288
    %v292 = vsel %vm291, %v206, -inf
    %v293 = vsel %vm291, %v284, -inf
    %vm294 = vcmask 64512
    %v295 = vsel %vm294, %v292, -inf
    %296 = vmax.xlane.f32.xlu0 %v295
    %v297 = vpop.xlane.xlu0 %296
    %v298 = vsel %vm294, %v293, -inf
    %299 = vmax.xlane.f32.xlu0 %v298
    %v300 = vpop.xlane.xlu0 %299
    %v301 = vsub.f32 %v292, %v297
    %v302 = vsub.f32 %v293, %v300
    %v303 = vmul.f32 %v301, 1.442695
    %v304 = vpow.pop %v303
    %v305 = vmul.f32 %v302, 1.442695
    %v306 = vpow.pop %v305
    %v307 = vsel %vm294, %v304, 0.0
    %308 = vadd.xlane.f32.xlu0 %v307
    %v309 = vpop.xlane.xlu0 %308
    %v310 = vsel %vm294, %v306, 0.0
    %311 = vadd.xlane.f32.xlu0 %v310
    %v312 = vpop.xlane.xlu0 %311
    %v313 = vrcp.pop %v309
    %v314 = vrcp.pop %v312
    %v315 = vmul.f32 %v304, %v313
    %v316 = vmul.f32 %v306, %v314
    %317 = vrot.lane.b32.xlu0 %v120, 96
    %v318 = vpop.permute.xlu0 %317
    %v321 = vsel %vm294, %v315, 0
    %323 = vmatprep.subr.mxu0 0.0
    %324 = vmatpush1.msra.mxu0 0.0
    %325 = vmatprep.subr.mxu0 0.0
    %326 = vmatpush1.msra.mxu0 0.0
    %327 = vmatprep.subr.mxu0 0.0
    %328 = vmatpush1.msra.mxu0 0.0
    %329 = vmatprep.subr.mxu0 0.0
    %330 = vmatpush1.msra.mxu0 0.0
    %331 = vmatprep.subr.mxu0 0.0
    %332 = vmatpush1.msra.mxu0 0.0
    %333 = vmatprep.subr.mxu0 0.0
    %334 = vmatpush1.msra.mxu0 0.0
    %335 = vmatprep.subr.mxu0 0.0
    %336 = vmatpush1.msra.mxu0 0.0
    %337 = vmatprep.subr.mxu0 0.0
    %338 = vmatpush1.msra.mxu0 0.0
    %339 = vmatprep.subr.mxu0 0.0
    %340 = vmatpush1.msra.mxu0 0.0
    %341 = vmatprep.subr.mxu0 0.0
    %342 = vmatpush1.msra.mxu0 0.0
    %343 = vmatprep.subr.mxu0 0.0
    %344 = vmatpush1.msra.mxu0 0.0
    %345 = vmatprep.subr.mxu0 0.0
    %346 = vmatpush1.msra.mxu0 0.0
    %347 = vmatprep.subr.mxu0 0.0
    %348 = vmatpush1.msra.mxu0 0.0
    %349 = vmatprep.subr.mxu0 0.0
    %350 = vmatpush1.msra.mxu0 0.0
    %351 = vmatprep.subr.mxu0 0.0
    %352 = vmatpush1.msra.mxu0 0.0
    %353 = vmatprep.subr.mxu0 0.0
    %354 = vmatpush1.msra.mxu0 %v318
    %355 = vmatprep.subr.mxu0 0.0
    %356 = vmatpush2.msra.mxu0 0.0
    %357 = vmatprep.subr.mxu0 0.0
    %358 = vmatpush2.msra.mxu0 0.0
    %359 = vmatprep.subr.mxu0 0.0
    %360 = vmatpush2.msra.mxu0 0.0
    %361 = vmatprep.subr.mxu0 0.0
    %362 = vmatpush2.msra.mxu0 0.0
    %363 = vmatprep.subr.mxu0 0.0
    %364 = vmatpush2.msra.mxu0 0.0
    %365 = vmatprep.subr.mxu0 0.0
    %366 = vmatpush2.msra.mxu0 0.0
    %367 = vmatprep.subr.mxu0 0.0
    %368 = vmatpush2.msra.mxu0 0.0
    %369 = vmatprep.subr.mxu0 0.0
    %370 = vmatpush2.msra.mxu0 0.0
    %371 = vmatprep.subr.mxu0 0.0
    %372 = vmatpush2.msra.mxu0 0.0
    %373 = vmatprep.subr.mxu0 0.0
    %374 = vmatpush2.msra.mxu0 0.0
    %375 = vmatprep.subr.mxu0 0.0
    %376 = vmatpush2.msra.mxu0 0.0
    %377 = vmatprep.subr.mxu0 0.0
    %378 = vmatpush2.msra.mxu0 0.0
    %379 = vmatprep.subr.mxu0 0.0
    %380 = vmatpush2.msra.mxu0 0.0
    %381 = vmatprep.subr.mxu0 0.0
    %382 = vmatpush2.msra.mxu0 0.0
    %383 = vmatprep.subr.mxu0 0.0
    %384 = vmatpush2.msra.mxu0 0.0
    %385 = vmatprep.subr.mxu0 0.0
    %386 = vmatpush2.msra.mxu0 0.0
    %387 = vmatprep.mubr.f32.mxu0 0.0
    %388 = vmatmul.mubr.f32.gmra.mxu0 %v321
    %v389 = vpop.f32.mrf.mxu0
    %v390 = vadd.f32 0.0, %v389
    %v391 = vpop.f32.mrf.mxu0
    %392 = vdwg.mxu0
    %393 = vrot.lane.b32.xlu0 %v125, 96
    %v394 = vpop.permute.xlu0 %393
    %v397 = vsel %vm294, %v316, 0
    %399 = vmatprep.subr.mxu0 0.0
    %400 = vmatpush1.msra.mxu0 0.0
    %401 = vmatprep.subr.mxu0 0.0
    %402 = vmatpush1.msra.mxu0 0.0
    %403 = vmatprep.subr.mxu0 0.0
    %404 = vmatpush1.msra.mxu0 0.0
    %405 = vmatprep.subr.mxu0 0.0
    %406 = vmatpush1.msra.mxu0 0.0
    %407 = vmatprep.subr.mxu0 0.0
    %408 = vmatpush1.msra.mxu0 0.0
    %409 = vmatprep.subr.mxu0 0.0
    %410 = vmatpush1.msra.mxu0 0.0
    %411 = vmatprep.subr.mxu0 0.0
    %412 = vmatpush1.msra.mxu0 0.0
    %413 = vmatprep.subr.mxu0 0.0
    %414 = vmatpush1.msra.mxu0 0.0
    %415 = vmatprep.subr.mxu0 0.0
    %416 = vmatpush1.msra.mxu0 0.0
    %417 = vmatprep.subr.mxu0 0.0
    %418 = vmatpush1.msra.mxu0 0.0
    %419 = vmatprep.subr.mxu0 0.0
    %420 = vmatpush1.msra.mxu0 0.0
    %421 = vmatprep.subr.mxu0 0.0
    %422 = vmatpush1.msra.mxu0 0.0
    %423 = vmatprep.subr.mxu0 0.0
    %424 = vmatpush1.msra.mxu0 0.0
    %425 = vmatprep.subr.mxu0 0.0
    %426 = vmatpush1.msra.mxu0 0.0
    %427 = vmatprep.subr.mxu0 0.0
    %428 = vmatpush1.msra.mxu0 0.0
    %429 = vmatprep.subr.mxu0 0.0
    %430 = vmatpush1.msra.mxu0 %v394
    %431 = vmatprep.subr.mxu0 0.0
    %432 = vmatpush2.msra.mxu0 0.0
    %433 = vmatprep.subr.mxu0 0.0
    %434 = vmatpush2.msra.mxu0 0.0
    %435 = vmatprep.subr.mxu0 0.0
    %436 = vmatpush2.msra.mxu0 0.0
    %437 = vmatprep.subr.mxu0 0.0
    %438 = vmatpush2.msra.mxu0 0.0
    %439 = vmatprep.subr.mxu0 0.0
    %440 = vmatpush2.msra.mxu0 0.0
    %441 = vmatprep.subr.mxu0 0.0
    %442 = vmatpush2.msra.mxu0 0.0
    %443 = vmatprep.subr.mxu0 0.0
    %444 = vmatpush2.msra.mxu0 0.0
    %445 = vmatprep.subr.mxu0 0.0
    %446 = vmatpush2.msra.mxu0 0.0
    %447 = vmatprep.subr.mxu0 0.0
    %448 = vmatpush2.msra.mxu0 0.0
    %449 = vmatprep.subr.mxu0 0.0
    %450 = vmatpush2.msra.mxu0 0.0
    %451 = vmatprep.subr.mxu0 0.0
    %452 = vmatpush2.msra.mxu0 0.0
    %453 = vmatprep.subr.mxu0 0.0
    %454 = vmatpush2.msra.mxu0 0.0
    %455 = vmatprep.subr.mxu0 0.0
    %456 = vmatpush2.msra.mxu0 0.0
    %457 = vmatprep.subr.mxu0 0.0
    %458 = vmatpush2.msra.mxu0 0.0
    %459 = vmatprep.subr.mxu0 0.0
    %460 = vmatpush2.msra.mxu0 0.0
    %461 = vmatprep.subr.mxu0 0.0
    %462 = vmatpush2.msra.mxu0 0.0
    %463 = vmatprep.mubr.f32.mxu0 0.0
    %464 = vmatmul.mubr.f32.gmra.mxu0 %v397
    %v465 = vpop.f32.mrf.mxu0
    %v466 = vadd.f32 0.0, %v465
    %v467 = vpop.f32.mrf.mxu0
    %468 = vdwg.mxu0
    %v471 = vrot.slane %v466, 7
    %vm472 = vcmask 1041409
    %v473 = vsel %vm472, %v471, %v390
    %vm475 = vcmask 123904
    %476 = vst.msk [vmem:[#allocation7] sm:$0x3] %vm475, %v473
    %vm477 = vcmask 1042434
    %v478 = vsel %vm477, %v471, %v390
    %479 = vrot.lane.b32.xlu0 %v478, 16
    %v480 = vpop.permute.xlu0 %479
    %vm482 = vcmask 256129
    %483 = vst.msk [vmem:[#allocation7 - $0x1] sm:$0x6] %vm482, %v480
    %vm484 = vcmask 1043459
    %v485 = vsel %vm484, %v471, %v390
    %486 = vrot.lane.b32.xlu0 %v485, 32
    %v487 = vpop.permute.xlu0 %486
    %vm489 = vcmask 388354
    %490 = vst.msk [vmem:[#allocation7 - $0x2] sm:$0xc] %vm489, %v487
    %vm491 = vcmask 1044484
    %v492 = vsel %vm491, %v471, %v390
    %493 = vrot.lane.b32.xlu0 %v492, 48
    %v494 = vpop.permute.xlu0 %493
    %vm496 = vcmask 520579
    %497 = vst.msk [vmem:[#allocation7 - $0x3] sm:$0x18] %vm496, %v494
    %vm498 = vcmask 1045509
    %v499 = vsel %vm498, %v471, %v390
    %500 = vrot.lane.b32.xlu0 %v499, 64
    %v501 = vpop.permute.xlu0 %500
    %vm503 = vcmask 652804
    %504 = vst.msk [vmem:[#allocation7 - $0x4] sm:$0x30] %vm503, %v501
    %vm505 = vcmask 1046534
    %v506 = vsel %vm505, %v471, %v390
    %507 = vrot.lane.b32.xlu0 %v506, 80
    %v508 = vpop.permute.xlu0 %507
    %vm510 = vcmask 785029
    %511 = vst.msk [vmem:[#allocation7 - $0x5] sm:$0x60] %vm510, %v508
    %vm512 = vcmask 1047559
    %v513 = vsel %vm512, %v471, %v390
    %514 = vrot.lane.b32.xlu0 %v513, 96
    %v515 = vpop.permute.xlu0 %514
    %vm517 = vcmask 917254
    %518 = vst.msk [vmem:[#allocation7 - $0x6] sm:$0xc0] %vm517, %v515
    %519 = vrot.lane.b32.xlu0 %v390, 112
    %v520 = vpop.permute.xlu0 %519
    %521 = vrot.lane.b32.xlu0 %v471, 112
    %v522 = vpop.permute.xlu0 %521
    %vm525 = vcmask 1048455
    %526 = vst.msk [vmem:[#allocation7 - $0x7] sm:$0x80] %vm525, %v520
    %vm527 = vcmask 1041280
    %528 = vst.msk [vmem:[#allocation7 + $0x1] sm:$0x1] %vm527, %v522
    // Predicated region
    $region18: #{tpu_custom_call.1} parent=1 // pred_check
      _
    $region19: #{tpu_custom_call.1} parent=1 // pred_check_branch
      %530 = sbr.rel (0) target = $region21
    $region20: #{tpu_custom_call.1} parent=1 // pred_region
      %s532 = ssub.s32 32, 32
      %533 = vsyncadd [#allocation4], %s532
      %s535 = sshll.u32 [#allocation7], 4
      %s536 = int_to_ptr.vmem [resolvable:$true] %s535
      %538 = dma.vmem_to_hbm [thread:$0]  %s536, 32, %s2, [#allocation4]
    $region21: #{tpu_custom_call.1} parent=1 // pred_fallthru
      _
    // Predicated region
    $region22: #{tpu_custom_call.1} parent=1 // pred_check
      _
    $region23: #{tpu_custom_call.1} parent=1 // pred_check_branch
      %540 = sbr.rel (0) target = $region25
    $region24: #{tpu_custom_call.1} parent=1 // pred_region
      %541 = dma.done [#allocation4], 32
    $region25: #{tpu_custom_call.1} parent=1 // pred_fallthru
      _
    %542 = vsyncpa [#allocation3], 1
    %543 = vsyncpa [#allocation6], 1
    %544 = vsyncpa [#allocation4], 1

</llo_original>
